<compile_context>
chip_gen: v7x
topology: tpu7x:2x2x1
jax: 0.10.0
libtpu: 0.0.40
codegen_flags: <defaults>
</compile_context>

<pallas_src>
import jax
import jax.numpy as jnp
from jax.experimental import pallas as pl
from jax.experimental.pallas import tpu as pltpu

LANES = 128  # lane-dense output slab; wrapper extracts column 0


def critic_head_kernel(x_ref, w1_ref, b1_ref, w2_ref, b2_ref, out_ref):
    # x_ref:   (B, C, HW)  activations, HW on the lane axis
    # w1_ref:  (C, C)      conv_base weight (C_out, C_in)
    # b1_ref:  (C, 1)      conv_base bias (broadcasts over pixels)
    # w2_ref:  (C, 1)      conv_value weight as a column
    # b2_ref:  (1,)        conv_value bias, SMEM scalar
    # out_ref: (B, LANES)  result broadcast across lanes; wrapper takes [:, 0]
    batch = x_ref.shape[0]
    inv_hw = 1.0 / x_ref.shape[2]

    w1 = w1_ref[...]
    b1 = b1_ref[...]          # (C, 1) hoisted broadcast epilogue
    w2 = w2_ref[...]          # (C, 1)
    b2 = b2_ref[0]            # scalar from SMEM

    # Small batch: static unroll, one clean 2-D MXU matmul per element.
    for b in range(batch):
        xb = x_ref[b]                                                   # (C, HW)
        h = jnp.dot(w1, xb, preferred_element_type=jnp.float32) + b1    # (C, HW) f32
        # TODO(synk): ActivationFactory is not specified in the module; using ReLU.
        h = jnp.maximum(h, 0.0)

        # Spatial mean commutes with the linear conv_value:
        #   mean_p(w2 . h_p + b2) = w2 . mean_p(h_p) + b2
        # Lane reduction over pixels, then sublane reduction over channels.
        ch_sum = jnp.sum(h, axis=-1, keepdims=True)                     # (C, 1)
        val = jnp.sum(ch_sum * w2) * inv_hw + b2                        # scalar

        # Lane-dense store of this batch element's row.
        out_ref[b:b + 1, :] = jnp.full((1, LANES), val, dtype=out_ref.dtype)


def critic_head_forward(x_nchw, w1, b1, w2, b2, *, matmul_dtype=jnp.float32):
    """x_nchw: (B, C, H, W). w1: (C, C), b1: (C,), w2: (1, C), b2: (1,).

    matmul_dtype=jnp.bfloat16 halves HBM traffic / roughly doubles MXU rate on
    v6e/v7x for large shapes (accumulation stays f32); f32 default keeps exact
    parity with the PyTorch module at small shapes.
    """
    B, C, H, W = x_nchw.shape
    HW = H * W

    # Free reshape: NCHW already has H*W contiguous -> (B, C, HW). No transpose.
    x = jnp.asarray(x_nchw).reshape(B, C, HW).astype(matmul_dtype)

    w1_m = jnp.asarray(w1, jnp.float32).astype(matmul_dtype)   # (C_out, C_in)
    b1_c = jnp.asarray(b1, jnp.float32).reshape(C, 1)
    w2_c = jnp.asarray(w2, jnp.float32).reshape(1, C).T        # (C, 1)
    b2_s = jnp.asarray(b2, jnp.float32).reshape(1)

    out = pl.pallas_call(
        critic_head_kernel,
        out_shape=jax.ShapeDtypeStruct((B, LANES), jnp.float32),
        # Single grid step: at small (B, C, HW) the kernel is overhead-bound,
        # so the whole problem is one resident VMEM slab.
        # TODO(synk): for large B or HW, add a batch/HW grid axis ("parallel"
        # on batch for v7x's 2 TCs) and re-derive tiles for v7x's 64 MiB VMEM.
        grid=(1,),
        in_specs=[
            pl.BlockSpec((B, C, HW), lambda i: (0, 0, 0)),
            pl.BlockSpec((C, C), lambda i: (0, 0)),
            pl.BlockSpec((C, 1), lambda i: (0, 0)),
            pl.BlockSpec((C, 1), lambda i: (0, 0)),
            pl.BlockSpec(memory_space=pltpu.MemorySpace.SMEM),   # b2 scalar
        ],
        out_specs=pl.BlockSpec((B, LANES), lambda i: (0, 0)),
        compiler_params=pltpu.CompilerParams(dimension_semantics=("arbitrary",)),
    )(x, w1_m, b1_c, w2_c, b2_s)

    # postprocess_value is abstract on BaseCriticHead (shape (batch,) -> (batch,)).
    # TODO(synk): subclasses define postprocess_value; identity used here.
    return out[:, 0]


def _orthogonal(key, rows, cols, scale):
    """Deterministic orthogonal init (QR with sign correction), like torch's."""
    n = max(rows, cols)
    a = jax.random.normal(key, (n, n), dtype=jnp.float32)
    q, r = jnp.linalg.qr(a)
    q = q * jnp.sign(jnp.diagonal(r))
    return scale * q[:rows, :cols]


def _reference(x_nchw, w1, b1, w2, b2):
    B, C, H, W = x_nchw.shape
    x = jnp.transpose(x_nchw, (0, 2, 3, 1)).reshape(B, H * W, C)
    h = jnp.maximum(x @ w1.T + b1, 0.0)
    v = h @ w2.T + b2  # (B, HW, 1)
    return v[..., 0].mean(axis=-1)


if __name__ == "__main__":
    B, D_MODEL, H, W = 2, 32, 16, 16
    key = jax.random.PRNGKey(0)
    kx, kw1, kb1, kw2, kb2 = jax.random.split(key, 5)

    x = jax.random.normal(kx, (B, D_MODEL, H, W), dtype=jnp.float32)

    # conv_base: orthogonal init (gain sqrt(2)); conv_value: orthogonal, scale=1.
    # 1x1 kernels -> plain matrices.
    w1 = _orthogonal(kw1, D_MODEL, D_MODEL, scale=jnp.sqrt(2.0))   # (C_out, C_in)
    b1 = 0.01 * jax.random.normal(kb1, (D_MODEL,), dtype=jnp.float32)
    w2 = _orthogonal(kw2, 1, D_MODEL, scale=1.0)                   # (1, C_in)
    b2 = 0.01 * jax.random.normal(kb2, (1,), dtype=jnp.float32)

    out = critic_head_forward(x, w1, b1, w2, b2)
    out = jax.block_until_ready(out)

    ref = _reference(x, w1, b1, w2, b2)
    assert out.shape == (B,)
    assert jnp.allclose(out, ref, atol=1e-4, rtol=1e-4), (out, ref)

    print("KERNEL_OK")
</pallas_src>

<mosaic_0001>
module attributes {stable_mosaic.version = 11 : i64} {
  func.func @critic_head_kernel(%arg0: i32, %arg1: memref<2x32x256xf32, #tpu.memory_space<vmem>>, %arg2: memref<32x32xf32, #tpu.memory_space<vmem>>, %arg3: memref<32x1xf32, #tpu.memory_space<vmem>>, %arg4: memref<32x1xf32, #tpu.memory_space<vmem>>, %arg5: memref<1xf32, #tpu.memory_space<smem>>, %arg6: memref<2x128xf32, #tpu.memory_space<vmem>>) attributes {dimension_semantics = [#tpu.dimension_semantics<arbitrary>], iteration_bounds = array<i64: 1>, scalar_prefetch = 0 : i64, scratch_operands = 0 : i64, tpu.core_type = #tpu.core_type<tc>, window_params = [{pipeline_mode = #tpu.pipeline_mode<synchronous>, transform_indices = @transform_0, window_bounds = array<i64: 2, 32, 256>}, {pipeline_mode = #tpu.pipeline_mode<synchronous>, transform_indices = @transform_1, window_bounds = array<i64: 32, 32>}, {pipeline_mode = #tpu.pipeline_mode<synchronous>, transform_indices = @transform_2, window_bounds = array<i64: 32, 1>}, {pipeline_mode = #tpu.pipeline_mode<synchronous>, transform_indices = @transform_3, window_bounds = array<i64: 32, 1>}, {transform_indices = @transform_4, window_bounds = array<i64: 1>}, {pipeline_mode = #tpu.pipeline_mode<synchronous>, transform_indices = @transform_5, window_bounds = array<i64: 2, 128>}]} {
    %c0 = arith.constant 0 : index
    %c0_0 = arith.constant 0 : index
    %0 = vector.load %arg2[%c0, %c0_0] : memref<32x32xf32, #tpu.memory_space<vmem>>, vector<32x32xf32>
    %c0_1 = arith.constant 0 : index
    %c0_2 = arith.constant 0 : index
    %1 = vector.load %arg3[%c0_1, %c0_2] : memref<32x1xf32, #tpu.memory_space<vmem>>, vector<32x1xf32>
    %c0_3 = arith.constant 0 : index
    %c0_4 = arith.constant 0 : index
    %2 = vector.load %arg4[%c0_3, %c0_4] : memref<32x1xf32, #tpu.memory_space<vmem>>, vector<32x1xf32>
    %c0_5 = arith.constant 0 : index
    %3 = memref.load %arg5[%c0_5] : memref<1xf32, #tpu.memory_space<smem>>
    %c0_6 = arith.constant 0 : index
    %c0_7 = arith.constant 0 : index
    %c0_8 = arith.constant 0 : index
    %4 = vector.load %arg1[%c0_6, %c0_7, %c0_8] : memref<2x32x256xf32, #tpu.memory_space<vmem>>, vector<1x32x256xf32>
    %5 = vector.shape_cast %4 : vector<1x32x256xf32> to vector<32x256xf32>
    %cst = arith.constant dense<0.000000e+00> : vector<32x256xf32>
    %6 = tpu.matmul %0, %5, %cst {dimension_numbers = #tpu.dot_dimension_numbers<[1], [0], [0], [1], [0, 0, 1, 1], [], []>} : vector<32x32xf32>, vector<32x256xf32>, vector<32x256xf32> -> vector<32x256xf32>
    %7 = vector.broadcast %1 : vector<32x1xf32> to vector<32x256xf32>
    %8 = arith.addf %6, %7 : vector<32x256xf32>
    %cst_9 = arith.constant 0.000000e+00 : f32
    %9 = vector.broadcast %cst_9 : f32 to vector<32x256xf32>
    %10 = arith.maximumf %8, %9 : vector<32x256xf32>
    %cst_10 = arith.constant dense<0.000000e+00> : vector<32xf32>
    %11 = vector.multi_reduction <add>, %10, %cst_10 [1] : vector<32x256xf32> to vector<32xf32>
    %12 = vector.shape_cast %11 : vector<32xf32> to vector<32x1xf32>
    %13 = arith.mulf %12, %2 : vector<32x1xf32>
    %14 = vector.shape_cast %13 : vector<32x1xf32> to vector<1x32x1xf32>
    %cst_11 = arith.constant dense<0.000000e+00> : vector<1xf32>
    %15 = vector.multi_reduction <add>, %14, %cst_11 [1, 2] : vector<1x32x1xf32> to vector<1xf32>
    %16 = vector.shape_cast %15 : vector<1xf32> to vector<1x1x1xf32>
    %17 = vector.extract %16[0, 0, 0] : f32 from vector<1x1x1xf32>
    %cst_12 = arith.constant 3.906250e-03 : f32
    %18 = arith.mulf %17, %cst_12 : f32
    %19 = arith.addf %18, %3 : f32
    %20 = vector.broadcast %19 : f32 to vector<1x128xf32>
    %c0_13 = arith.constant 0 : index
    %c0_14 = arith.constant 0 : index
    %21 = vector.load %arg6[%c0_13, %c0_14] : memref<2x128xf32, #tpu.memory_space<vmem>>, vector<1x128xf32>
    tpu.vector_store %arg6[%c0_13, %c0_14], %20 {strides = array<i32>} : memref<2x128xf32, #tpu.memory_space<vmem>>, vector<1x128xf32>,
    %c1 = arith.constant 1 : index
    %c0_15 = arith.constant 0 : index
    %c0_16 = arith.constant 0 : index
    %22 = vector.load %arg1[%c1, %c0_15, %c0_16] : memref<2x32x256xf32, #tpu.memory_space<vmem>>, vector<1x32x256xf32>
    %23 = vector.shape_cast %22 : vector<1x32x256xf32> to vector<32x256xf32>
    %cst_17 = arith.constant dense<0.000000e+00> : vector<32x256xf32>
    %24 = tpu.matmul %0, %23, %cst_17 {dimension_numbers = #tpu.dot_dimension_numbers<[1], [0], [0], [1], [0, 0, 1, 1], [], []>} : vector<32x32xf32>, vector<32x256xf32>, vector<32x256xf32> -> vector<32x256xf32>
    %25 = vector.broadcast %1 : vector<32x1xf32> to vector<32x256xf32>
    %26 = arith.addf %24, %25 : vector<32x256xf32>
    %cst_18 = arith.constant 0.000000e+00 : f32
    %27 = vector.broadcast %cst_18 : f32 to vector<32x256xf32>
    %28 = arith.maximumf %26, %27 : vector<32x256xf32>
    %cst_19 = arith.constant dense<0.000000e+00> : vector<32xf32>
    %29 = vector.multi_reduction <add>, %28, %cst_19 [1] : vector<32x256xf32> to vector<32xf32>
    %30 = vector.shape_cast %29 : vector<32xf32> to vector<32x1xf32>
    %31 = arith.mulf %30, %2 : vector<32x1xf32>
    %32 = vector.shape_cast %31 : vector<32x1xf32> to vector<1x32x1xf32>
    %cst_20 = arith.constant dense<0.000000e+00> : vector<1xf32>
    %33 = vector.multi_reduction <add>, %32, %cst_20 [1, 2] : vector<1x32x1xf32> to vector<1xf32>
    %34 = vector.shape_cast %33 : vector<1xf32> to vector<1x1x1xf32>
    %35 = vector.extract %34[0, 0, 0] : f32 from vector<1x1x1xf32>
    %cst_21 = arith.constant 3.906250e-03 : f32
    %36 = arith.mulf %35, %cst_21 : f32
    %37 = arith.addf %36, %3 : f32
    %38 = vector.broadcast %37 : f32 to vector<1x128xf32>
    %c1_22 = arith.constant 1 : index
    %c0_23 = arith.constant 0 : index
    %39 = vector.load %arg6[%c1_22, %c0_23] : memref<2x128xf32, #tpu.memory_space<vmem>>, vector<1x128xf32>
    tpu.vector_store %arg6[%c1_22, %c0_23], %38 {strides = array<i32>} : memref<2x128xf32, #tpu.memory_space<vmem>>, vector<1x128xf32>,
    return
  }
  func.func @transform_0(%arg0: i32) -> (i32, i32, i32) {
    %c0_i32 = arith.constant 0 : i32
    %c0_i32_0 = arith.constant 0 : i32
    %c0_i32_1 = arith.constant 0 : i32
    %c0_i32_2 = arith.constant 0 : i32
    return %c0_i32, %c0_i32_0, %c0_i32_1 : i32, i32, i32
  }
  func.func @transform_1(%arg0: i32) -> (i32, i32) {
    %c0_i32 = arith.constant 0 : i32
    %c0_i32_0 = arith.constant 0 : i32
    %c0_i32_1 = arith.constant 0 : i32
    return %c0_i32, %c0_i32_0 : i32, i32
  }
  func.func @transform_2(%arg0: i32) -> (i32, i32) {
    %c0_i32 = arith.constant 0 : i32
    %c0_i32_0 = arith.constant 0 : i32
    %c0_i32_1 = arith.constant 0 : i32
    return %c0_i32, %c0_i32_0 : i32, i32
  }
  func.func @transform_3(%arg0: i32) -> (i32, i32) {
    %c0_i32 = arith.constant 0 : i32
    %c0_i32_0 = arith.constant 0 : i32
    %c0_i32_1 = arith.constant 0 : i32
    return %c0_i32, %c0_i32_0 : i32, i32
  }
  func.func @transform_4(%arg0: i32) -> i32 {
    %c0_i32 = arith.constant 0 : i32
    %c0_i32_0 = arith.constant 0 : i32
    return %c0_i32 : i32
  }
  func.func @transform_5(%arg0: i32) -> (i32, i32) {
    %c0_i32 = arith.constant 0 : i32
    %c0_i32_0 = arith.constant 0 : i32
    %c0_i32_1 = arith.constant 0 : i32
    return %c0_i32, %c0_i32_0 : i32, i32
  }
}

</mosaic_0001>

<llo_original>
// kernel: tpu_custom_call.1
$region0: #{tpu_custom_call.1}
  #allocation0 [shape = 'u32[]', space=smem, size = 0x4, offset = 0x4, fixed_abs, tag = 'smem constant byte address 0x4 - core index']
  #allocation1 [shape = 'u32[144,128]{1,0:T(1,128)}', space=vmem, size = 0x12000, scoped, tag = 'internal scratch']
  #allocation2 [shape = 'f32[1]{0:T(128)S(6)}', space=smem, size = 0x200, scoped, tag = 'scoped memory for tpu_custom_call.1']
  %s0 = inlined_call_operand.hbm [shape: f32[2,32,256], index: 0, kind: input, shape index: {}]
  %s1 = inlined_call_operand.vmem [shape: f32[32,32], index: 1, kind: input, shape index: {}]
  %s2 = inlined_call_operand.vmem [shape: f32[32,1], index: 2, kind: input, shape index: {}]
  %s3 = inlined_call_operand.vmem [shape: f32[32,1], index: 3, kind: input, shape index: {}]
  %s4 = inlined_call_operand.<no memory space> [shape: f32[1], index: 4, kind: input, shape index: {}]
  %s5 = inlined_call_operand.hbm [shape: f32[2,128], index: 5, kind: output, shape index: {}]
  %s6 = sld [smem:[#allocation0]]
  $region34: #{tpu_custom_call.1} parent=0
    _
  %s8 = ssub.s32 1, %s6
  %s9 = scalar_select 0, %s8, %s6
  %10 = sst [smem:[#allocation2]] %s4
  $region1: #{tpu_custom_call.1} parent=0
    #allocation3 [shape = 'u8[65536]{0}', space=vmem, size = 0x10000, scoped, tag = 'input window, operand 0, single buffered']
    #allocation4 [shape = 's32[1]{0}', space=sflag, size = 0x4, scoped, tag = 'scoped memory for tpu_custom_call.1']
    #allocation5 [shape = 's32[1]{0}', space=sflag, size = 0x4, scoped, tag = 'scoped memory for tpu_custom_call.1']
    #allocation6 [shape = 'u8[1024]{0}', space=vmem, size = 0x400, scoped, tag = 'output window, operand 0, single buffered']
    %11 = vsyncpa [#allocation4], 0
    %12 = vsyncpa [#allocation5], 0
    // Predicated region
    $region2: #{tpu_custom_call.1} parent=1 // pred_check
      _
    $region3: #{tpu_custom_call.1} parent=1 // pred_check_branch
      %14 = sbr.rel (0) target = $region5
    $region4: #{tpu_custom_call.1} parent=1 // pred_region
      %s16 = ssub.s32 2048, 2048
      %17 = vsyncadd [#allocation4], %s16
      %s18 = sshll.u32 [#allocation3], 4
      %s19 = int_to_ptr.vmem [resolvable:$true] %s18
      %24 = dma.hbm_to_vmem [thread:$0]  %s0, 2048, %s19, [#allocation4], 256, 256, 16
    $region5: #{tpu_custom_call.1} parent=1 // pred_fallthru
      _
    // Predicated region
    $region6: #{tpu_custom_call.1} parent=1 // pred_check
      _
    $region7: #{tpu_custom_call.1} parent=1 // pred_check_branch
      %26 = sbr.rel (0) target = $region9
    $region8: #{tpu_custom_call.1} parent=1 // pred_region
      _
    $region9: #{tpu_custom_call.1} parent=1 // pred_fallthru
      _
    // Predicated region
    $region10: #{tpu_custom_call.1} parent=1 // pred_check
      _
    $region11: #{tpu_custom_call.1} parent=1 // pred_check_branch
      %28 = sbr.rel (0) target = $region13
    $region12: #{tpu_custom_call.1} parent=1 // pred_region
      _
    $region13: #{tpu_custom_call.1} parent=1 // pred_fallthru
      _
    // Predicated region
    $region14: #{tpu_custom_call.1} parent=1 // pred_check
      _
    $region15: #{tpu_custom_call.1} parent=1 // pred_check_branch
      %30 = sbr.rel (0) target = $region17
    $region16: #{tpu_custom_call.1} parent=1 // pred_region
      _
    $region17: #{tpu_custom_call.1} parent=1 // pred_fallthru
      _
    // Predicated region
    $region18: #{tpu_custom_call.1} parent=1 // pred_check
      _
    $region19: #{tpu_custom_call.1} parent=1 // pred_check_branch
      %32 = sbr.rel (0) target = $region21
    $region20: #{tpu_custom_call.1} parent=1 // pred_region
      _
    $region21: #{tpu_custom_call.1} parent=1 // pred_fallthru
      _
    // Predicated region
    $region22: #{tpu_custom_call.1} parent=1 // pred_check
      _
    $region23: #{tpu_custom_call.1} parent=1 // pred_check_branch
      %34 = sbr.rel (0) target = $region25
    $region24: #{tpu_custom_call.1} parent=1 // pred_region
      %35 = dma.done [#allocation4], 2048
    $region25: #{tpu_custom_call.1} parent=1 // pred_fallthru
      _
    %v36 = vld [vmem:[%s1] sm:$0xff]
    %v37 = vld [vmem:[%s1 + $0x8] sm:$0xff]
    %v38 = vld [vmem:[%s1 + $0x10] sm:$0xff]
    %v39 = vld [vmem:[%s1 + $0x18] sm:$0xff]
    %v40 = vld [vmem:[%s2] sm:$0xff]
    %v41 = vld [vmem:[%s2 + $0x8] sm:$0xff]
    %v42 = vld [vmem:[%s2 + $0x10] sm:$0xff]
    %v43 = vld [vmem:[%s2 + $0x18] sm:$0xff]
    %v44 = vld [vmem:[%s3] sm:$0xff]
    %v45 = vld [vmem:[%s3 + $0x8] sm:$0xff]
    %v46 = vld [vmem:[%s3 + $0x10] sm:$0xff]
    %v47 = vld [vmem:[%s3 + $0x18] sm:$0xff]
    %s48 = sld [smem:[#allocation2]]
    %v49 = vld [vmem:[#allocation3] sm:$0xff]
    %v50 = vld [vmem:[#allocation3 + $0x8] sm:$0xff]
    %v51 = vld [vmem:[#allocation3 + $0x10] sm:$0xff]
    %v52 = vld [vmem:[#allocation3 + $0x18] sm:$0xff]
    %v53 = vld [vmem:[#allocation3 + $0x20] sm:$0xff]
    %v54 = vld [vmem:[#allocation3 + $0x28] sm:$0xff]
    %v55 = vld [vmem:[#allocation3 + $0x30] sm:$0xff]
    %v56 = vld [vmem:[#allocation3 + $0x38] sm:$0xff]
    %58 = vset.pattern.permute.xlu0 0
    %59 = vperm.xlu0 %58, %v40
    %v60 = vpop.permute.xlu0 %59
    %63 = vset.pattern.permute.xlu0 0
    %64 = vperm.xlu0 %63, %v41
    %v65 = vpop.permute.xlu0 %64
    %68 = vset.pattern.permute.xlu0 0
    %69 = vperm.xlu0 %68, %v42
    %v70 = vpop.permute.xlu0 %69
    %73 = vset.pattern.permute.xlu0 0
    %74 = vperm.xlu0 %73, %v43
    %v75 = vpop.permute.xlu0 %74
    %vm77 = vcmask 261120
    %v79 = vsel %vm77, %v36, 0
    %v82 = vsel %vm77, %v37, 0
    %v85 = vsel %vm77, %v38, 0
    %v88 = vsel %vm77, %v39, 0
    %90 = vmatprep.subr.mxu0 %v50
    %91 = vmatpush1.msra.mxu0 %v49
    %92 = vmatprep.subr.mxu0 %v52
    %93 = vmatpush1.msra.mxu0 %v51
    %94 = vmatprep.subr.mxu0 %v54
    %95 = vmatpush1.msra.mxu0 %v53
    %96 = vmatprep.subr.mxu0 %v56
    %97 = vmatpush1.msra.mxu0 %v55
    %98 = vmatprep.subr.mxu0 0.0
    %99 = vmatpush1.msra.mxu0 0.0
    %100 = vmatprep.subr.mxu0 0.0
    %101 = vmatpush1.msra.mxu0 0.0
    %102 = vmatprep.subr.mxu0 0.0
    %103 = vmatpush1.msra.mxu0 0.0
    %104 = vmatprep.subr.mxu0 0.0
    %105 = vmatpush1.msra.mxu0 0.0
    %106 = vmatprep.subr.mxu0 0.0
    %107 = vmatpush1.msra.mxu0 0.0
    %108 = vmatprep.subr.mxu0 0.0
    %109 = vmatpush1.msra.mxu0 0.0
    %110 = vmatprep.subr.mxu0 0.0
    %111 = vmatpush1.msra.mxu0 0.0
    %112 = vmatprep.subr.mxu0 0.0
    %113 = vmatpush1.msra.mxu0 0.0
    %114 = vmatprep.subr.mxu0 0.0
    %115 = vmatpush1.msra.mxu0 0.0
    %116 = vmatprep.subr.mxu0 0.0
    %117 = vmatpush1.msra.mxu0 0.0
    %118 = vmatprep.subr.mxu0 0.0
    %119 = vmatpush1.msra.mxu0 0.0
    %120 = vmatprep.subr.mxu0 0.0
    %121 = vmatpush1.msra.mxu0 0.0
    %122 = vmatprep.subr.mxu0 0.0
    %123 = vmatpush1.msra.mxu0 0.0
    %124 = vmatprep.subr.mxu0 0.0
    %125 = vmatpush1.msra.mxu0 0.0
    %126 = vmatprep.subr.mxu0 0.0
    %127 = vmatpush1.msra.mxu0 0.0
    %128 = vmatprep.subr.mxu0 0.0
    %129 = vmatpush1.msra.mxu0 0.0
    %130 = vmatprep.subr.mxu0 0.0
    %131 = vmatpush1.msra.mxu0 0.0
    %132 = vmatprep.subr.mxu0 0.0
    %133 = vmatpush1.msra.mxu0 0.0
    %134 = vmatprep.subr.mxu0 0.0
    %135 = vmatpush1.msra.mxu0 0.0
    %136 = vmatprep.subr.mxu0 0.0
    %137 = vmatpush1.msra.mxu0 0.0
    %138 = vmatprep.subr.mxu0 0.0
    %139 = vmatpush1.msra.mxu0 0.0
    %140 = vmatprep.subr.mxu0 0.0
    %141 = vmatpush1.msra.mxu0 0.0
    %142 = vmatprep.subr.mxu0 0.0
    %143 = vmatpush1.msra.mxu0 0.0
    %144 = vmatprep.subr.mxu0 0.0
    %145 = vmatpush1.msra.mxu0 0.0
    %146 = vmatprep.subr.mxu0 0.0
    %147 = vmatpush1.msra.mxu0 0.0
    %148 = vmatprep.subr.mxu0 0.0
    %149 = vmatpush1.msra.mxu0 0.0
    %150 = vmatprep.subr.mxu0 0.0
    %151 = vmatpush1.msra.mxu0 0.0
    %152 = vmatprep.subr.mxu0 0.0
    %153 = vmatpush1.msra.mxu0 0.0
    %154 = vmatprep.mubr.f32.mxu0 0.0
    %155 = vmatmul.mubr.f32.gmra.mrb[0].mxu0 %v79
    %v156 = vpop.f32.mrb[0].mxu0
    %v157 = vadd.f32 %v60, %v156
    %v158 = vpop.f32.mrb[0].mxu0
    %v159 = vadd.f32 %v60, %v158
    %160 = vmatprep.mubr.f32.mxu0 0.0
    %161 = vmatmul.mubr.f32.gmra.mrb[0].mxu0 %v82
    %v162 = vpop.f32.mrb[0].mxu0
    %v163 = vadd.f32 %v65, %v162
    %v164 = vpop.f32.mrb[0].mxu0
    %v165 = vadd.f32 %v65, %v164
    %166 = vmatprep.mubr.f32.mxu0 0.0
    %167 = vmatmul.mubr.f32.gmra.mrb[0].mxu0 %v85
    %v168 = vpop.f32.mrb[0].mxu0
    %v169 = vadd.f32 %v70, %v168
    %v170 = vpop.f32.mrb[0].mxu0
    %v171 = vadd.f32 %v70, %v170
    %172 = vmatprep.mubr.f32.mxu0 0.0
    %173 = vmatmul.mubr.f32.gmra.mrb[0].mxu0 %v88
    %v174 = vpop.f32.mrb[0].mxu0
    %v175 = vadd.f32 %v75, %v174
    %v176 = vpop.f32.mrb[0].mxu0
    %v177 = vadd.f32 %v75, %v176
    %178 = vdwg.mxu0
    %v179 = vmax.f32 %v157, 0.0
    %v180 = vmax.f32 %v159, 0.0
    %v181 = vmax.f32 %v163, 0.0
    %v182 = vmax.f32 %v165, 0.0
    %v183 = vmax.f32 %v169, 0.0
    %v184 = vmax.f32 %v171, 0.0
    %v185 = vmax.f32 %v175, 0.0
    %v186 = vmax.f32 %v177, 0.0
    %v187 = vadd.f32 %v179, %v180
    %188 = vadd.xlane.f32.xlu0 %v187
    %v189 = vpop.xlane.xlu0 %188
    %v190 = vadd.f32 %v181, %v182
    %191 = vadd.xlane.f32.xlu0 %v190
    %v192 = vpop.xlane.xlu0 %191
    %v193 = vadd.f32 %v183, %v184
    %194 = vadd.xlane.f32.xlu0 %v193
    %v195 = vpop.xlane.xlu0 %194
    %v196 = vadd.f32 %v185, %v186
    %197 = vadd.xlane.f32.xlu0 %v196
    %v198 = vpop.xlane.xlu0 %197
    %v199 = vmul.f32 %v189, %v44
    %v200 = vmul.f32 %v192, %v45
    %v201 = vmul.f32 %v195, %v46
    %v202 = vmul.f32 %v198, %v47
    %vm203 = vcmask 7168
    %v204 = vsel %vm203, %v199, 0.0
    %v205 = vsel %vm203, %v200, 0.0
    %v206 = vadd.f32 %v204, %v205
    %v207 = vsel %vm203, %v201, 0.0
    %v208 = vadd.f32 %v206, %v207
    %v209 = vsel %vm203, %v202, 0.0
    %v210 = vadd.f32 %v208, %v209
    %211 = vadd.xlane.f32.xlu0 %v210
    %v212 = vpop.xlane.xlu0 %211
    %v213 = vrot.slane %v212, 4
    %v214 = vadd.f32 %v212, %v213
    %v215 = vrot.slane %v214, 2
    %v216 = vadd.f32 %v214, %v215
    %v217 = vrot.slane %v216, 1
    %v218 = vadd.f32 %v216, %v217
    %s219 = vtos %v218
    %s220 = smul.f32 %s219, 0.00390625
    %s221 = sadd.f32 %s220, %s48
    %v222 = vstv %s221
    %223 = vst [vmem:[#allocation6] sm:$0x1] %v222
    %s224 = scalar_lea.vmem [#allocation3], 64
    %v225 = vld [vmem:[%s224] sm:$0xff]
    %v226 = vld [vmem:[%s224 + $0x8] sm:$0xff]
    %v227 = vld [vmem:[%s224 + $0x10] sm:$0xff]
    %v228 = vld [vmem:[%s224 + $0x18] sm:$0xff]
    %v229 = vld [vmem:[%s224 + $0x20] sm:$0xff]
    %v230 = vld [vmem:[%s224 + $0x28] sm:$0xff]
    %v231 = vld [vmem:[%s224 + $0x30] sm:$0xff]
    %v232 = vld [vmem:[%s224 + $0x38] sm:$0xff]
    %233 = vmatprep.subr.mxu0 %v226
    %234 = vmatpush1.msra.mxu0 %v225
    %235 = vmatprep.subr.mxu0 %v228
    %236 = vmatpush1.msra.mxu0 %v227
    %237 = vmatprep.subr.mxu0 %v230
    %238 = vmatpush1.msra.mxu0 %v229
    %239 = vmatprep.subr.mxu0 %v232
    %240 = vmatpush1.msra.mxu0 %v231
    %241 = vmatprep.subr.mxu0 0.0
    %242 = vmatpush1.msra.mxu0 0.0
    %243 = vmatprep.subr.mxu0 0.0
    %244 = vmatpush1.msra.mxu0 0.0
    %245 = vmatprep.subr.mxu0 0.0
    %246 = vmatpush1.msra.mxu0 0.0
    %247 = vmatprep.subr.mxu0 0.0
    %248 = vmatpush1.msra.mxu0 0.0
    %249 = vmatprep.subr.mxu0 0.0
    %250 = vmatpush1.msra.mxu0 0.0
    %251 = vmatprep.subr.mxu0 0.0
    %252 = vmatpush1.msra.mxu0 0.0
    %253 = vmatprep.subr.mxu0 0.0
    %254 = vmatpush1.msra.mxu0 0.0
    %255 = vmatprep.subr.mxu0 0.0
    %256 = vmatpush1.msra.mxu0 0.0
    %257 = vmatprep.subr.mxu0 0.0
    %258 = vmatpush1.msra.mxu0 0.0
    %259 = vmatprep.subr.mxu0 0.0
    %260 = vmatpush1.msra.mxu0 0.0
    %261 = vmatprep.subr.mxu0 0.0
    %262 = vmatpush1.msra.mxu0 0.0
    %263 = vmatprep.subr.mxu0 0.0
    %264 = vmatpush1.msra.mxu0 0.0
    %265 = vmatprep.subr.mxu0 0.0
    %266 = vmatpush1.msra.mxu0 0.0
    %267 = vmatprep.subr.mxu0 0.0
    %268 = vmatpush1.msra.mxu0 0.0
    %269 = vmatprep.subr.mxu0 0.0
    %270 = vmatpush1.msra.mxu0 0.0
    %271 = vmatprep.subr.mxu0 0.0
    %272 = vmatpush1.msra.mxu0 0.0
    %273 = vmatprep.subr.mxu0 0.0
    %274 = vmatpush1.msra.mxu0 0.0
    %275 = vmatprep.subr.mxu0 0.0
    %276 = vmatpush1.msra.mxu0 0.0
    %277 = vmatprep.subr.mxu0 0.0
    %278 = vmatpush1.msra.mxu0 0.0
    %279 = vmatprep.subr.mxu0 0.0
    %280 = vmatpush1.msra.mxu0 0.0
    %281 = vmatprep.subr.mxu0 0.0
    %282 = vmatpush1.msra.mxu0 0.0
    %283 = vmatprep.subr.mxu0 0.0
    %284 = vmatpush1.msra.mxu0 0.0
    %285 = vmatprep.subr.mxu0 0.0
    %286 = vmatpush1.msra.mxu0 0.0
    %287 = vmatprep.subr.mxu0 0.0
    %288 = vmatpush1.msra.mxu0 0.0
    %289 = vmatprep.subr.mxu0 0.0
    %290 = vmatpush1.msra.mxu0 0.0
    %291 = vmatprep.subr.mxu0 0.0
    %292 = vmatpush1.msra.mxu0 0.0
    %293 = vmatprep.subr.mxu0 0.0
    %294 = vmatpush1.msra.mxu0 0.0
    %295 = vmatprep.subr.mxu0 0.0
    %296 = vmatpush1.msra.mxu0 0.0
    %297 = vmatprep.mubr.f32.mxu0 0.0
    %298 = vmatmul.mubr.f32.gmra.mrb[0].mxu0 %v79
    %v299 = vpop.f32.mrb[0].mxu0
    %v300 = vadd.f32 %v60, %v299
    %v301 = vpop.f32.mrb[0].mxu0
    %v302 = vadd.f32 %v60, %v301
    %303 = vmatprep.mubr.f32.mxu0 0.0
    %304 = vmatmul.mubr.f32.gmra.mrb[0].mxu0 %v82
    %v305 = vpop.f32.mrb[0].mxu0
    %v306 = vadd.f32 %v65, %v305
    %v307 = vpop.f32.mrb[0].mxu0
    %v308 = vadd.f32 %v65, %v307
    %309 = vmatprep.mubr.f32.mxu0 0.0
    %310 = vmatmul.mubr.f32.gmra.mrb[0].mxu0 %v85
    %v311 = vpop.f32.mrb[0].mxu0
    %v312 = vadd.f32 %v70, %v311
    %v313 = vpop.f32.mrb[0].mxu0
    %v314 = vadd.f32 %v70, %v313
    %315 = vmatprep.mubr.f32.mxu0 0.0
    %316 = vmatmul.mubr.f32.gmra.mrb[0].mxu0 %v88
    %v317 = vpop.f32.mrb[0].mxu0
    %v318 = vadd.f32 %v75, %v317
    %v319 = vpop.f32.mrb[0].mxu0
    %v320 = vadd.f32 %v75, %v319
    %321 = vdwg.mxu0
    %v322 = vmax.f32 %v300, 0.0
    %v323 = vmax.f32 %v302, 0.0
    %v324 = vmax.f32 %v306, 0.0
    %v325 = vmax.f32 %v308, 0.0
    %v326 = vmax.f32 %v312, 0.0
    %v327 = vmax.f32 %v314, 0.0
    %v328 = vmax.f32 %v318, 0.0
    %v329 = vmax.f32 %v320, 0.0
    %v330 = vadd.f32 %v322, %v323
    %331 = vadd.xlane.f32.xlu0 %v330
    %v332 = vpop.xlane.xlu0 %331
    %v333 = vadd.f32 %v324, %v325
    %334 = vadd.xlane.f32.xlu0 %v333
    %v335 = vpop.xlane.xlu0 %334
    %v336 = vadd.f32 %v326, %v327
    %337 = vadd.xlane.f32.xlu0 %v336
    %v338 = vpop.xlane.xlu0 %337
    %v339 = vadd.f32 %v328, %v329
    %340 = vadd.xlane.f32.xlu0 %v339
    %v341 = vpop.xlane.xlu0 %340
    %v342 = vmul.f32 %v332, %v44
    %v343 = vmul.f32 %v335, %v45
    %v344 = vmul.f32 %v338, %v46
    %v345 = vmul.f32 %v341, %v47
    %v346 = vsel %vm203, %v342, 0.0
    %v347 = vsel %vm203, %v343, 0.0
    %v348 = vadd.f32 %v346, %v347
    %v349 = vsel %vm203, %v344, 0.0
    %v350 = vadd.f32 %v348, %v349
    %v351 = vsel %vm203, %v345, 0.0
    %v352 = vadd.f32 %v350, %v351
    %353 = vadd.xlane.f32.xlu0 %v352
    %v354 = vpop.xlane.xlu0 %353
    %v355 = vrot.slane %v354, 4
    %v356 = vadd.f32 %v354, %v355
    %v357 = vrot.slane %v356, 2
    %v358 = vadd.f32 %v356, %v357
    %v359 = vrot.slane %v358, 1
    %v360 = vadd.f32 %v358, %v359
    %s361 = vtos %v360
    %s362 = smul.f32 %s361, 0.00390625
    %s363 = sadd.f32 %s362, %s48
    %v364 = vstv %s363
    %365 = vst [vmem:[#allocation6 + $0x1] sm:$0x1] %v364
    // Predicated region
    $region26: #{tpu_custom_call.1} parent=1 // pred_check
      _
    $region27: #{tpu_custom_call.1} parent=1 // pred_check_branch
      %367 = sbr.rel (0) target = $region29
    $region28: #{tpu_custom_call.1} parent=1 // pred_region
      %s369 = ssub.s32 32, 32
      %370 = vsyncadd [#allocation5], %s369
      %s372 = sshll.u32 [#allocation6], 4
      %s373 = int_to_ptr.vmem [resolvable:$true] %s372
      %375 = dma.vmem_to_hbm [thread:$0]  %s373, 32, %s5, [#allocation5]
    $region29: #{tpu_custom_call.1} parent=1 // pred_fallthru
      _
    // Predicated region
    $region30: #{tpu_custom_call.1} parent=1 // pred_check
      _
    $region31: #{tpu_custom_call.1} parent=1 // pred_check_branch
      %377 = sbr.rel (0) target = $region33
    $region32: #{tpu_custom_call.1} parent=1 // pred_region
      %378 = dma.done [#allocation5], 32
    $region33: #{tpu_custom_call.1} parent=1 // pred_fallthru
      _
    %379 = vsyncpa [#allocation4], 1
    %380 = vsyncpa [#allocation5], 1

</llo_original>
